<compile_context>
chip_gen: v6e
topology: v6e:2x2x1
jax: 0.10.0
libtpu: 0.0.40
codegen_flags: <defaults>
</compile_context>

<pallas_src>
import numpy as np
import jax
import jax.numpy as jnp
from jax.experimental import pallas as pl
from jax.experimental.pallas import tpu as pltpu


def _round_up(x, m):
    return ((x + m - 1) // m) * m


# --------------------- FC projection kernel (runs once) ---------------------
def _fc_kernel(x_ref, w_ref, o_ref):
    o_ref[...] = jnp.dot(x_ref[...], w_ref[...],
                         preferred_element_type=jnp.float32)


def _project_mmsbm(mmsbm_val, w_pad):
    """[Em, emb] @ [emb, D_pad] -> [Em_pad, D_pad]; padded rows are zero."""
    Em, emb = mmsbm_val.shape
    D_pad = w_pad.shape[1]
    tm = min(512, _round_up(max(Em, 8), 8))
    Em_pad = _round_up(max(Em, 8), tm)
    x = jnp.zeros((Em_pad, emb), jnp.float32).at[:Em].set(
        mmsbm_val.astype(jnp.float32))
    return pl.pallas_call(
        _fc_kernel,
        out_shape=jax.ShapeDtypeStruct((Em_pad, D_pad), jnp.float32),
        grid=(Em_pad // tm,),
        in_specs=[pl.BlockSpec((tm, emb), lambda i: (i, 0)),
                  pl.BlockSpec((emb, D_pad), lambda i: (0, 0))],
        out_specs=pl.BlockSpec((tm, D_pad), lambda i: (i, 0)),
        compiler_params=pltpu.CompilerParams(
            dimension_semantics=("parallel",)),
    )(x, w_pad)


# -------------------- fused coalesce / scatter-add kernel -------------------
def _make_scatter_kernel(num_nodes, count_col, d_pad):
    NN = num_nodes * num_nodes

    def kernel(flat_ref, vals_ref, out_ref):
        tm = out_ref.shape[0]
        base = pl.program_id(0) * tm
        row_ids = base + jax.lax.broadcasted_iota(jnp.int32, (tm, 1), 0)
        # scatter-add == one_hot @ vals on the MXU; the all-ones count column
        # of `vals` folds the presence count into the same matmul.  Padded
        # slots carry flat index -1, which never matches a row id.
        one_hot = (row_ids == flat_ref[...]).astype(jnp.float32)  # [tm, Etot]
        acc = jnp.dot(one_hot, vals_ref[...],
                      preferred_element_type=jnp.float32)         # [tm, d_pad]
        # self loops (fill_value=0.0): zero value, +1 presence at flat index
        # i*(N+1) -- computed analytically, no one-hot materialized.
        col_ids = jax.lax.broadcasted_iota(jnp.int32, (tm, d_pad), 1)
        is_self = (row_ids % (num_nodes + 1) == 0) & (row_ids < NN)
        out_ref[...] = acc + jnp.where(
            is_self & (col_ids == count_col), 1.0, 0.0)

    return kernel


def mmsbm_linear_edge_encoder(edge_index, edge_attr, mmsbm_index, mmsbm_val,
                              fc_weight, num_nodes):
    """fc_weight: [out_dim, emb_dim] (PyTorch nn.Linear layout, no bias).

    Returns (dense_vals [N*N, out_dim], count [N*N]) on device; sparse
    (out_idx, out_val) extraction is done by extract_sparse().
    """
    N = int(num_nodes)
    assert N < 46341, "flat index i*N + j would overflow int32"
    NN = N * N
    out_dim, emb_dim = fc_weight.shape
    Ee = edge_index.shape[1]
    Em = mmsbm_index.shape[1]

    # lane-dense slab layout: cols [0, out_dim) = values, col out_dim = count.
    count_col = out_dim
    D_pad = _round_up(out_dim + 1, 128)

    # ---- FC (no bias), hoisted out of the scatter grid (computed once) ----
    w_pad = jnp.zeros((emb_dim, D_pad), jnp.float32).at[:, :out_dim].set(
        fc_weight.astype(jnp.float32).T)
    mm_proj = _project_mmsbm(mmsbm_val, w_pad)              # [Em_pad, D_pad]

    # ---- fused contraction operands ----
    Etot = Ee + Em
    Etot_pad = _round_up(max(Etot, 256), 256)               # feed 2x256 MXU
    flat_edge = (edge_index[0] * N + edge_index[1]).astype(jnp.int32)
    flat_mm = (mmsbm_index[0] * N + mmsbm_index[1]).astype(jnp.int32)
    flat = jnp.full((1, Etot_pad), -1, jnp.int32)
    flat = flat.at[0, :Ee].set(flat_edge).at[0, Ee:Etot].set(flat_mm)

    vals = jnp.zeros((Etot_pad, D_pad), jnp.float32)
    vals = vals.at[:Ee, :out_dim].set(edge_attr.astype(jnp.float32))
    vals = vals.at[Ee:Etot, :].set(mm_proj[:Em])
    vals = vals.at[:Etot, count_col].set(1.0)               # presence column

    # ---- tile the NN axis; keep flat/vals resident ----
    # Per-step working set ~ one-hot [tm, Etot] + 2x output tile [tm, D_pad];
    # budget sized so double-buffering fits v7x's smaller VMEM.
    budget = 12 * 1024 * 1024
    per_row = (Etot_pad + 2 * D_pad) * 4
    tm = max(8, min(1024, (budget // per_row) // 8 * 8))
    tm = min(tm, _round_up(NN, 8))
    NN_pad = _round_up(NN, tm)

    resident = 2 * Etot_pad * (D_pad + 1) * 4               # flat + vals bufs
    per_step = 2 * tm * D_pad * 4 + 2 * tm * Etot_pad * 4
    vmem_limit = int(min(48 * 1024 * 1024,
                         max(32 * 1024 * 1024, 2 * (resident + per_step))))

    dense = pl.pallas_call(
        _make_scatter_kernel(N, count_col, D_pad),
        out_shape=jax.ShapeDtypeStruct((NN_pad, D_pad), jnp.float32),
        grid=(NN_pad // tm,),
        in_specs=[pl.BlockSpec((1, Etot_pad), lambda i: (0, 0)),
                  pl.BlockSpec((Etot_pad, D_pad), lambda i: (0, 0))],
        out_specs=pl.BlockSpec((tm, D_pad), lambda i: (i, 0)),
        compiler_params=pltpu.CompilerParams(
            dimension_semantics=("parallel",),
            vmem_limit_bytes=vmem_limit),
    )(flat, vals)

    # slice on device so only NN*(out_dim+1) floats ever leave the device.
    return dense[:NN, :out_dim], dense[:NN, count_col]


def extract_sparse(dense_vals, count, num_nodes):
    """dense [N*N, D] + presence count -> (out_idx [2,K], out_val [K,D]),
    row-major sorted exactly like torch_sparse.coalesce."""
    # TODO(synk): for large N, do this compaction on device (bounded-size
    # nonzero / compaction kernel) instead of host-side glue.
    dense_vals = np.asarray(dense_vals)
    count = np.asarray(count)
    flat = np.nonzero(count > 0)[0]                          # sorted ascending
    out_idx = np.stack([flat // num_nodes, flat % num_nodes], axis=0)
    return out_idx, dense_vals[flat]


if __name__ == "__main__":
    key = jax.random.PRNGKey(0)
    k1, k2, k3, k4, k5 = jax.random.split(key, 5)

    N = 8            # num_nodes
    emb_dim = 16
    out_dim = 32
    E_edge = 12
    E_mm = 20

    edge_index = jax.random.randint(k1, (2, E_edge), 0, N, dtype=jnp.int32)
    edge_attr = jax.random.normal(k2, (E_edge, out_dim), dtype=jnp.float32)
    mmsbm_index = jax.random.randint(k3, (2, E_mm), 0, N, dtype=jnp.int32)
    mmsbm_val = jax.random.normal(k4, (E_mm, emb_dim), dtype=jnp.float32)

    # nn.Linear(emb_dim, out_dim, bias=False) + xavier_uniform_ init
    limit = np.sqrt(6.0 / (emb_dim + out_dim))
    fc_weight = jax.random.uniform(k5, (out_dim, emb_dim), jnp.float32,
                                   minval=-limit, maxval=limit)

    dense_vals, count = mmsbm_linear_edge_encoder(
        edge_index, edge_attr, mmsbm_index, mmsbm_val, fc_weight, N)
    jax.block_until_ready((dense_vals, count))

    out_idx, out_val = extract_sparse(dense_vals, count, N)

    # --- reference (numpy) for correctness ---
    ei = np.asarray(edge_index)
    ea = np.asarray(edge_attr)
    mi = np.asarray(mmsbm_index)
    mv = np.asarray(mmsbm_val) @ np.asarray(fc_weight).T
    dense_ref = np.zeros((N * N, out_dim), np.float32)
    present = np.zeros((N * N,), bool)
    present[np.arange(N) * N + np.arange(N)] = True          # self loops
    for e in range(ei.shape[1]):
        f = ei[0, e] * N + ei[1, e]
        dense_ref[f] += ea[e]
        present[f] = True
    for e in range(mi.shape[1]):
        f = mi[0, e] * N + mi[1, e]
        dense_ref[f] += mv[e]
        present[f] = True
    flat_ref = np.nonzero(present)[0]
    idx_ref = np.stack([flat_ref // N, flat_ref % N], axis=0)
    val_ref = dense_ref[flat_ref]

    assert np.array_equal(out_idx, idx_ref), "index mismatch"
    np.testing.assert_allclose(out_val, val_ref, rtol=1e-5, atol=1e-5)

    print("KERNEL_OK")
</pallas_src>

<mosaic_0001>
module attributes {stable_mosaic.version = 11 : i64} {
  func.func @_fc_kernel(%arg0: i32, %arg1: memref<24x16xf32, #tpu.memory_space<vmem>>, %arg2: memref<16x128xf32, #tpu.memory_space<vmem>>, %arg3: memref<24x128xf32, #tpu.memory_space<vmem>>) attributes {dimension_semantics = [#tpu.dimension_semantics<parallel>], iteration_bounds = array<i64: 1>, scalar_prefetch = 0 : i64, scratch_operands = 0 : i64, tpu.core_type = #tpu.core_type<tc>, window_params = [{transform_indices = @transform_0, window_bounds = array<i64: 24, 16>}, {pipeline_mode = #tpu.pipeline_mode<synchronous>, transform_indices = @transform_1, window_bounds = array<i64: 16, 128>}, {transform_indices = @transform_2, window_bounds = array<i64: 24, 128>}]} {
    %c0 = arith.constant 0 : index
    %c0_0 = arith.constant 0 : index
    %0 = vector.load %arg1[%c0, %c0_0] : memref<24x16xf32, #tpu.memory_space<vmem>>, vector<24x16xf32>
    %c0_1 = arith.constant 0 : index
    %c0_2 = arith.constant 0 : index
    %1 = vector.load %arg2[%c0_1, %c0_2] : memref<16x128xf32, #tpu.memory_space<vmem>>, vector<16x128xf32>
    %cst = arith.constant dense<0.000000e+00> : vector<24x128xf32>
    %2 = tpu.matmul %0, %1, %cst {dimension_numbers = #tpu.dot_dimension_numbers<[1], [0], [0], [1], [0, 0, 1, 1], [], []>} : vector<24x16xf32>, vector<16x128xf32>, vector<24x128xf32> -> vector<24x128xf32>
    %c0_3 = arith.constant 0 : index
    %c0_4 = arith.constant 0 : index
    %3 = vector.load %arg3[%c0_3, %c0_4] : memref<24x128xf32, #tpu.memory_space<vmem>>, vector<24x128xf32>
    tpu.vector_store %arg3[%c0_3, %c0_4], %2 {strides = array<i32>} : memref<24x128xf32, #tpu.memory_space<vmem>>, vector<24x128xf32>,
    return
  }
  func.func @transform_0(%arg0: i32) -> (i32, i32) {
    %c0_i32 = arith.constant 0 : i32
    %c0_i32_0 = arith.constant 0 : i32
    return %arg0, %c0_i32 : i32, i32
  }
  func.func @transform_1(%arg0: i32) -> (i32, i32) {
    %c0_i32 = arith.constant 0 : i32
    %c0_i32_0 = arith.constant 0 : i32
    %c0_i32_1 = arith.constant 0 : i32
    return %c0_i32, %c0_i32_0 : i32, i32
  }
  func.func @transform_2(%arg0: i32) -> (i32, i32) {
    %c0_i32 = arith.constant 0 : i32
    %c0_i32_0 = arith.constant 0 : i32
    return %arg0, %c0_i32 : i32, i32
  }
}

</mosaic_0001>

<llo_original>
// kernel: tpu_custom_call.1
$region0: #{tpu_custom_call.1}
  #allocation0 [shape = 'u32[]', space=smem, size = 0x4, offset = 0x4, fixed_abs, tag = 'smem constant byte address 0x4 - core index']
  #allocation1 [shape = 'u32[144,128]{1,0:T(1,128)}', space=vmem, size = 0x12000, scoped, tag = 'internal scratch']
  %s0 = inlined_call_operand.vmem [shape: f32[24,16], index: 0, kind: input, shape index: {}]
  %s1 = inlined_call_operand.vmem [shape: f32[16,128], index: 1, kind: input, shape index: {}]
  %s2 = inlined_call_operand.hbm [shape: f32[24,128], index: 2, kind: output, shape index: {}]
  %s3 = sld [smem:[#allocation0]]
  $region18: #{tpu_custom_call.1} parent=0
    _
  %s5 = ssub.s32 1, %s3
  %s6 = scalar_select 0, %s5, %s3
  $region1: #{tpu_custom_call.1} parent=0
    #allocation2 [shape = 'u8[12288]{0}', space=vmem, size = 0x3000, scoped, tag = 'output window, operand 0, single buffered']
    #allocation3 [shape = 's32[1]{0}', space=sflag, size = 0x4, scoped, tag = 'scoped memory for tpu_custom_call.1']
    %7 = vsyncpa [#allocation3], 0
    // Predicated region
    $region2: #{tpu_custom_call.1} parent=1 // pred_check
      _
    $region3: #{tpu_custom_call.1} parent=1 // pred_check_branch
      %9 = sbr.rel (0) target = $region5
    $region4: #{tpu_custom_call.1} parent=1 // pred_region
      _
    $region5: #{tpu_custom_call.1} parent=1 // pred_fallthru
      _
    // Predicated region
    $region6: #{tpu_custom_call.1} parent=1 // pred_check
      _
    $region7: #{tpu_custom_call.1} parent=1 // pred_check_branch
      %11 = sbr.rel (0) target = $region9
    $region8: #{tpu_custom_call.1} parent=1 // pred_region
      _
    $region9: #{tpu_custom_call.1} parent=1 // pred_fallthru
      _
    %v12 = vld [vmem:[%s0] sm:$0xff]
    %v13 = vld [vmem:[%s0 + $0x8] sm:$0xff]
    %v14 = vld [vmem:[%s0 + $0x10] sm:$0xff]
    %v15 = vld [vmem:[%s1] sm:$0xff]
    %v16 = vld [vmem:[%s1 + $0x8] sm:$0xff]
    %vm17 = vcmask 130048
    %v19 = vsel %vm17, %v12, 0
    %v22 = vsel %vm17, %v13, 0
    %v25 = vsel %vm17, %v14, 0
    %27 = vmatprep.subr.mxu0 0.0
    %28 = vmatpush1.msra.mxu0 0.0
    %29 = vmatprep.subr.mxu0 0.0
    %30 = vmatpush1.msra.mxu0 0.0
    %31 = vmatprep.subr.mxu0 0.0
    %32 = vmatpush1.msra.mxu0 0.0
    %33 = vmatprep.subr.mxu0 0.0
    %34 = vmatpush1.msra.mxu0 0.0
    %35 = vmatprep.subr.mxu0 0.0
    %36 = vmatpush1.msra.mxu0 0.0
    %37 = vmatprep.subr.mxu0 0.0
    %38 = vmatpush1.msra.mxu0 0.0
    %39 = vmatprep.subr.mxu0 0.0
    %40 = vmatpush1.msra.mxu0 0.0
    %41 = vmatprep.subr.mxu0 0.0
    %42 = vmatpush1.msra.mxu0 0.0
    %43 = vmatprep.subr.mxu0 0.0
    %44 = vmatpush1.msra.mxu0 0.0
    %45 = vmatprep.subr.mxu0 0.0
    %46 = vmatpush1.msra.mxu0 0.0
    %47 = vmatprep.subr.mxu0 0.0
    %48 = vmatpush1.msra.mxu0 0.0
    %49 = vmatprep.subr.mxu0 0.0
    %50 = vmatpush1.msra.mxu0 0.0
    %51 = vmatprep.subr.mxu0 0.0
    %52 = vmatpush1.msra.mxu0 0.0
    %53 = vmatprep.subr.mxu0 0.0
    %54 = vmatpush1.msra.mxu0 0.0
    %55 = vmatprep.subr.mxu0 0.0
    %56 = vmatpush1.msra.mxu0 %v16
    %57 = vmatprep.subr.mxu0 0.0
    %58 = vmatpush1.msra.mxu0 %v15
    %59 = vmatprep.subr.mxu0 0.0
    %60 = vmatpush2.msra.mxu0 0.0
    %61 = vmatprep.subr.mxu0 0.0
    %62 = vmatpush2.msra.mxu0 0.0
    %63 = vmatprep.subr.mxu0 0.0
    %64 = vmatpush2.msra.mxu0 0.0
    %65 = vmatprep.subr.mxu0 0.0
    %66 = vmatpush2.msra.mxu0 0.0
    %67 = vmatprep.subr.mxu0 0.0
    %68 = vmatpush2.msra.mxu0 0.0
    %69 = vmatprep.subr.mxu0 0.0
    %70 = vmatpush2.msra.mxu0 0.0
    %71 = vmatprep.subr.mxu0 0.0
    %72 = vmatpush2.msra.mxu0 0.0
    %73 = vmatprep.subr.mxu0 0.0
    %74 = vmatpush2.msra.mxu0 0.0
    %75 = vmatprep.subr.mxu0 0.0
    %76 = vmatpush2.msra.mxu0 0.0
    %77 = vmatprep.subr.mxu0 0.0
    %78 = vmatpush2.msra.mxu0 0.0
    %79 = vmatprep.subr.mxu0 0.0
    %80 = vmatpush2.msra.mxu0 0.0
    %81 = vmatprep.subr.mxu0 0.0
    %82 = vmatpush2.msra.mxu0 0.0
    %83 = vmatprep.subr.mxu0 0.0
    %84 = vmatpush2.msra.mxu0 0.0
    %85 = vmatprep.subr.mxu0 0.0
    %86 = vmatpush2.msra.mxu0 0.0
    %87 = vmatprep.subr.mxu0 0.0
    %88 = vmatpush2.msra.mxu0 0.0
    %89 = vmatprep.subr.mxu0 0.0
    %90 = vmatpush2.msra.mxu0 0.0
    %91 = vmatprep.mubr.f32.mxu0 0.0
    %92 = vmatmul.mubr.f32.gmra.mxu0 %v19
    %v93 = vpop.f32.mrf.mxu0
    %v94 = vadd.f32 0.0, %v93
    %v95 = vpop.f32.mrf.mxu0
    %96 = vmatprep.mubr.f32.mxu0 0.0
    %97 = vmatmul.mubr.f32.gmra.mxu0 %v22
    %v98 = vpop.f32.mrf.mxu0
    %v99 = vadd.f32 0.0, %v98
    %v100 = vpop.f32.mrf.mxu0
    %101 = vmatprep.mubr.f32.mxu0 0.0
    %102 = vmatmul.mubr.f32.gmra.mxu0 %v25
    %v103 = vpop.f32.mrf.mxu0
    %v104 = vadd.f32 0.0, %v103
    %v105 = vpop.f32.mrf.mxu0
    %106 = vdwg.mxu0
    %107 = vst [vmem:[#allocation2] sm:$0xff] %v94
    %108 = vst [vmem:[#allocation2 + $0x8] sm:$0xff] %v99
    %109 = vst [vmem:[#allocation2 + $0x10] sm:$0xff] %v104
    // Predicated region
    $region10: #{tpu_custom_call.1} parent=1 // pred_check
      _
    $region11: #{tpu_custom_call.1} parent=1 // pred_check_branch
      %111 = sbr.rel (0) target = $region13
    $region12: #{tpu_custom_call.1} parent=1 // pred_region
      %s113 = ssub.s32 384, 384
      %114 = vsyncadd [#allocation3], %s113
      %s115 = sshll.u32 [#allocation2], 4
      %s116 = int_to_ptr.vmem [resolvable:$true] %s115
      %121 = dma.vmem_to_hbm [thread:$0]  %s116, 384, %s2, [#allocation3], 128, 128, 8
    $region13: #{tpu_custom_call.1} parent=1 // pred_fallthru
      _
    // Predicated region
    $region14: #{tpu_custom_call.1} parent=1 // pred_check
      _
    $region15: #{tpu_custom_call.1} parent=1 // pred_check_branch
      %123 = sbr.rel (0) target = $region17
    $region16: #{tpu_custom_call.1} parent=1 // pred_region
      %124 = dma.done [#allocation3], 384
    $region17: #{tpu_custom_call.1} parent=1 // pred_fallthru
      _
    %125 = vsyncpa [#allocation3], 1

</llo_original>
